<compile_context>
chip_gen: v6e
topology: v6e:2x2x1
jax: 0.10.0
libtpu: 0.0.40
codegen_flags: <defaults>
</compile_context>

<pallas_src>
import math

import jax
import jax.numpy as jnp
from jax.experimental import pallas as pl
from jax.experimental.pallas import tpu as pltpu


def _log_prob_kernel(x_ref, loc_ref, niv_ref, const_ref, o_ref):
    # (TB, Dg) tile; params are resident (1, Dg) rows broadcast over rows.
    diff = x_ref[...] - loc_ref[...]
    o_ref[...] = diff * diff * niv_ref[...] + const_ref[...]


def _round_up(n, m):
    return ((n + m - 1) // m) * m


def _vmem_capacity_bytes():
    """Per-TensorCore VMEM capacity; conservative (v7x-safe) fallback."""
    try:
        return int(pltpu.get_tpu_info().vmem_capacity_bytes)
    except Exception:
        return 64 * 1024 * 1024


def normal_log_prob(x, loc, softplus_scale):
    """x: (B, D) f32, loc / softplus_scale: (D,) f32 -> (B, D) f32 log-probs."""
    B, D = x.shape
    x = x.astype(jnp.float32)
    loc = loc.astype(jnp.float32)
    softplus_scale = softplus_scale.astype(jnp.float32)

    # ---- per-D parameter math hoisted out of the kernel (O(D), not O(B*D)) --
    scale = jnp.logaddexp(jnp.float32(0.0), softplus_scale)      # softplus
    neg_inv_two_var = -0.5 / (scale * scale)                     # -1/(2 var)
    const = -(jnp.log(scale) + jnp.float32(0.5 * math.log(2.0 * math.pi)))

    # ---- lane-dense layout with zero padding --------------------------------
    # If D % 128 != 0, fold g rows into one so the last dim is a multiple of
    # 128 (free contiguous reshape) and tile the param rows g times.  If B is
    # not divisible by g, fall back to full-D blocks (legal: block last dim ==
    # full array dim), which is correct but uses masked stores.
    g = 1
    if D % 128 != 0:
        cand = 128 // math.gcd(D, 128)
        if B % cand == 0:
            g = cand
    rows, Dg = B // g, D * g

    x2 = x.reshape(rows, Dg)
    loc_row = jnp.tile(loc, g).reshape(1, Dg)
    niv_row = jnp.tile(neg_inv_two_var, g).reshape(1, Dg)
    const_row = jnp.tile(const, g).reshape(1, Dg)

    # ---- generation-aware tile / VMEM budget --------------------------------
    vmem_cap = _vmem_capacity_bytes()
    if vmem_cap >= 96 * 1024 * 1024:            # v5e / v6e: 128 MiB VMEM
        max_tile_bytes = 16 * 1024 * 1024
        vmem_soft_cap = 100 * 1024 * 1024
    else:                                        # v7x: 64 MiB VMEM per TC
        max_tile_bytes = 12 * 1024 * 1024
        vmem_soft_cap = 56 * 1024 * 1024

    row_bytes = Dg * 4
    tb_budget = max(8, (max_tile_bytes // row_bytes) // 8 * 8)
    if rows <= tb_budget:
        if rows >= 16:
            # Guarantee >=2 grid steps so the "parallel" axis can shard across
            # two TensorCores on v7x (negligible cost on v5e/v6e).
            TB = _round_up(pl.cdiv(rows, 2), 8)
        else:
            TB = rows                            # single full-extent block
    else:
        TB = tb_budget
    num_steps = pl.cdiv(rows, TB)

    tile_bytes = TB * Dg * 4
    vmem_limit = min(vmem_soft_cap,
                     max(32 * 1024 * 1024, 4 * tile_bytes + (1 << 20)))

    out2 = pl.pallas_call(
        _log_prob_kernel,
        out_shape=jax.ShapeDtypeStruct((rows, Dg), jnp.float32),
        grid_spec=pl.GridSpec(
            grid=(num_steps,),
            in_specs=[
                pl.BlockSpec((TB, Dg), lambda i: (i, 0)),   # x tile, streamed
                pl.BlockSpec((1, Dg), lambda i: (0, 0)),    # loc, resident
                pl.BlockSpec((1, Dg), lambda i: (0, 0)),    # -1/(2 var), resident
                pl.BlockSpec((1, Dg), lambda i: (0, 0)),    # additive const, resident
            ],
            out_specs=pl.BlockSpec((TB, Dg), lambda i: (i, 0)),
        ),
        compiler_params=pltpu.CompilerParams(
            dimension_semantics=("parallel",),
            vmem_limit_bytes=vmem_limit,
        ),
    )(x2, loc_row, niv_row, const_row)

    return out2.reshape(B, D)


def _reference_log_prob(x, loc, softplus_scale):
    scale = jnp.logaddexp(0.0, softplus_scale)
    return (
        -((x - loc) ** 2) / (2.0 * scale**2)
        - jnp.log(scale)
        - 0.5 * math.log(2.0 * math.pi)
    )


if __name__ == "__main__":
    key = jax.random.PRNGKey(0)

    # Case 1: module-sized example — Normal(shape=[32]) with standard_init
    # (loc=0, softplus_scale=log(e-1) so scale=1), batch of 8 samples.
    B, D = 8, 32
    k1, k2, k3 = jax.random.split(key, 3)
    x = jax.random.normal(k1, (B, D), dtype=jnp.float32)
    loc = jnp.zeros((D,), dtype=jnp.float32)
    softplus_scale = jnp.full((D,), math.log(math.e - 1.0), dtype=jnp.float32)

    out = jax.block_until_ready(normal_log_prob(x, loc, softplus_scale))
    ref = _reference_log_prob(x, loc, softplus_scale)
    assert out.shape == (B, D)
    assert jnp.allclose(out, ref, atol=1e-5, rtol=1e-5)

    # Case 2: lane-aligned D with non-trivial params (multi-step grid path).
    B2, D2 = 64, 128
    x2 = jax.random.normal(k2, (B2, D2), dtype=jnp.float32)
    loc2 = 0.1 * jax.random.normal(k3, (D2,), dtype=jnp.float32)
    sps2 = jnp.full((D2,), 0.25, dtype=jnp.float32)

    out2 = jax.block_until_ready(normal_log_prob(x2, loc2, sps2))
    ref2 = _reference_log_prob(x2, loc2, sps2)
    assert out2.shape == (B2, D2)
    assert jnp.allclose(out2, ref2, atol=1e-5, rtol=1e-5)

    print("KERNEL_OK")
</pallas_src>

<mosaic_0001>
module attributes {stable_mosaic.version = 11 : i64} {
  func.func @_log_prob_kernel(%arg0: i32, %arg1: memref<2x128xf32, #tpu.memory_space<vmem>>, %arg2: memref<1x128xf32, #tpu.memory_space<vmem>>, %arg3: memref<1x128xf32, #tpu.memory_space<vmem>>, %arg4: memref<1x128xf32, #tpu.memory_space<vmem>>, %arg5: memref<2x128xf32, #tpu.memory_space<vmem>>) attributes {dimension_semantics = [#tpu.dimension_semantics<parallel>], iteration_bounds = array<i64: 1>, scalar_prefetch = 0 : i64, scratch_operands = 0 : i64, tpu.core_type = #tpu.core_type<tc>, window_params = [{transform_indices = @transform_0, window_bounds = array<i64: 2, 128>}, {pipeline_mode = #tpu.pipeline_mode<synchronous>, transform_indices = @transform_1, window_bounds = array<i64: 1, 128>}, {pipeline_mode = #tpu.pipeline_mode<synchronous>, transform_indices = @transform_2, window_bounds = array<i64: 1, 128>}, {pipeline_mode = #tpu.pipeline_mode<synchronous>, transform_indices = @transform_3, window_bounds = array<i64: 1, 128>}, {transform_indices = @transform_4, window_bounds = array<i64: 2, 128>}]} {
    %c0 = arith.constant 0 : index
    %c0_0 = arith.constant 0 : index
    %0 = vector.load %arg1[%c0, %c0_0] : memref<2x128xf32, #tpu.memory_space<vmem>>, vector<2x128xf32>
    %c0_1 = arith.constant 0 : index
    %c0_2 = arith.constant 0 : index
    %1 = vector.load %arg2[%c0_1, %c0_2] : memref<1x128xf32, #tpu.memory_space<vmem>>, vector<1x128xf32>
    %2 = vector.broadcast %1 : vector<1x128xf32> to vector<2x128xf32>
    %3 = arith.subf %0, %2 : vector<2x128xf32>
    %4 = arith.mulf %3, %3 : vector<2x128xf32>
    %c0_3 = arith.constant 0 : index
    %c0_4 = arith.constant 0 : index
    %5 = vector.load %arg3[%c0_3, %c0_4] : memref<1x128xf32, #tpu.memory_space<vmem>>, vector<1x128xf32>
    %6 = vector.broadcast %5 : vector<1x128xf32> to vector<2x128xf32>
    %7 = arith.mulf %4, %6 : vector<2x128xf32>
    %c0_5 = arith.constant 0 : index
    %c0_6 = arith.constant 0 : index
    %8 = vector.load %arg4[%c0_5, %c0_6] : memref<1x128xf32, #tpu.memory_space<vmem>>, vector<1x128xf32>
    %9 = vector.broadcast %8 : vector<1x128xf32> to vector<2x128xf32>
    %10 = arith.addf %7, %9 : vector<2x128xf32>
    %c0_7 = arith.constant 0 : index
    %c0_8 = arith.constant 0 : index
    %11 = vector.load %arg5[%c0_7, %c0_8] : memref<2x128xf32, #tpu.memory_space<vmem>>, vector<2x128xf32>
    tpu.vector_store %arg5[%c0_7, %c0_8], %10 {strides = array<i32>} : memref<2x128xf32, #tpu.memory_space<vmem>>, vector<2x128xf32>,
    return
  }
  func.func @transform_0(%arg0: i32) -> (i32, i32) {
    %c0_i32 = arith.constant 0 : i32
    %c0_i32_0 = arith.constant 0 : i32
    return %arg0, %c0_i32 : i32, i32
  }
  func.func @transform_1(%arg0: i32) -> (i32, i32) {
    %c0_i32 = arith.constant 0 : i32
    %c0_i32_0 = arith.constant 0 : i32
    %c0_i32_1 = arith.constant 0 : i32
    return %c0_i32, %c0_i32_0 : i32, i32
  }
  func.func @transform_2(%arg0: i32) -> (i32, i32) {
    %c0_i32 = arith.constant 0 : i32
    %c0_i32_0 = arith.constant 0 : i32
    %c0_i32_1 = arith.constant 0 : i32
    return %c0_i32, %c0_i32_0 : i32, i32
  }
  func.func @transform_3(%arg0: i32) -> (i32, i32) {
    %c0_i32 = arith.constant 0 : i32
    %c0_i32_0 = arith.constant 0 : i32
    %c0_i32_1 = arith.constant 0 : i32
    return %c0_i32, %c0_i32_0 : i32, i32
  }
  func.func @transform_4(%arg0: i32) -> (i32, i32) {
    %c0_i32 = arith.constant 0 : i32
    %c0_i32_0 = arith.constant 0 : i32
    return %arg0, %c0_i32 : i32, i32
  }
}

</mosaic_0001>

<llo_original>
// kernel: tpu_custom_call.1
$region0: #{tpu_custom_call.1}
  #allocation0 [shape = 'u32[]', space=smem, size = 0x4, offset = 0x4, fixed_abs, tag = 'smem constant byte address 0x4 - core index']
  #allocation1 [shape = 'u32[144,128]{1,0:T(1,128)}', space=vmem, size = 0x12000, scoped, tag = 'internal scratch']
  %s0 = inlined_call_operand.hbm [shape: f32[2,128], index: 0, kind: input, shape index: {}]
  %s1 = inlined_call_operand.vmem [shape: f32[1,128], index: 1, kind: input, shape index: {}]
  %s2 = inlined_call_operand.vmem [shape: f32[1,128], index: 2, kind: input, shape index: {}]
  %s3 = inlined_call_operand.vmem [shape: f32[1,128], index: 3, kind: input, shape index: {}]
  %s4 = inlined_call_operand.hbm [shape: f32[2,128], index: 4, kind: output, shape index: {}]
  %s5 = sld [smem:[#allocation0]]
  $region30: #{tpu_custom_call.1} parent=0
    _
  %s7 = ssub.s32 1, %s5
  %s8 = scalar_select 0, %s7, %s5
  $region1: #{tpu_custom_call.1} parent=0
    #allocation2 [shape = 'u8[1024]{0}', space=vmem, size = 0x400, scoped, tag = 'input window, operand 0, single buffered']
    #allocation3 [shape = 's32[1]{0}', space=sflag, size = 0x4, scoped, tag = 'scoped memory for tpu_custom_call.1']
    #allocation4 [shape = 's32[1]{0}', space=sflag, size = 0x4, scoped, tag = 'scoped memory for tpu_custom_call.1']
    #allocation5 [shape = 'u8[1024]{0}', space=vmem, size = 0x400, scoped, tag = 'output window, operand 0, single buffered']
    %9 = vsyncpa [#allocation3], 0
    %10 = vsyncpa [#allocation4], 0
    // Predicated region
    $region2: #{tpu_custom_call.1} parent=1 // pred_check
      _
    $region3: #{tpu_custom_call.1} parent=1 // pred_check_branch
      %12 = sbr.rel (0) target = $region5
    $region4: #{tpu_custom_call.1} parent=1 // pred_region
      %s14 = ssub.s32 32, 32
      %15 = vsyncadd [#allocation3], %s14
      %s17 = sshll.u32 [#allocation2], 4
      %s18 = int_to_ptr.vmem [resolvable:$true] %s17
      %20 = dma.hbm_to_vmem [thread:$0]  %s0, 32, %s18, [#allocation3]
    $region5: #{tpu_custom_call.1} parent=1 // pred_fallthru
      _
    // Predicated region
    $region6: #{tpu_custom_call.1} parent=1 // pred_check
      _
    $region7: #{tpu_custom_call.1} parent=1 // pred_check_branch
      %22 = sbr.rel (0) target = $region9
    $region8: #{tpu_custom_call.1} parent=1 // pred_region
      _
    $region9: #{tpu_custom_call.1} parent=1 // pred_fallthru
      _
    // Predicated region
    $region10: #{tpu_custom_call.1} parent=1 // pred_check
      _
    $region11: #{tpu_custom_call.1} parent=1 // pred_check_branch
      %24 = sbr.rel (0) target = $region13
    $region12: #{tpu_custom_call.1} parent=1 // pred_region
      _
    $region13: #{tpu_custom_call.1} parent=1 // pred_fallthru
      _
    // Predicated region
    $region14: #{tpu_custom_call.1} parent=1 // pred_check
      _
    $region15: #{tpu_custom_call.1} parent=1 // pred_check_branch
      %26 = sbr.rel (0) target = $region17
    $region16: #{tpu_custom_call.1} parent=1 // pred_region
      _
    $region17: #{tpu_custom_call.1} parent=1 // pred_fallthru
      _
    // Predicated region
    $region18: #{tpu_custom_call.1} parent=1 // pred_check
      _
    $region19: #{tpu_custom_call.1} parent=1 // pred_check_branch
      %28 = sbr.rel (0) target = $region21
    $region20: #{tpu_custom_call.1} parent=1 // pred_region
      %29 = dma.done [#allocation3], 32
    $region21: #{tpu_custom_call.1} parent=1 // pred_fallthru
      _
    %v30 = vld [vmem:[#allocation2] sm:$0x3]
    %v31 = vld [vmem:[%s1] sm:$0x1]
    %v33 = vlaneseq
    %v34 = vshrl.u32 %v33, 7
    %v35 = vsub.s32 0, %v34
    %v36 = vrot.slane %v31, %v35
    %v38 = vsub.f32 %v30, %v36
    %v39 = vmul.f32 %v38, %v38
    %v40 = vld [vmem:[%s2] sm:$0x1]
    %v42 = vlaneseq
    %v43 = vshrl.u32 %v42, 7
    %v44 = vsub.s32 0, %v43
    %v45 = vrot.slane %v40, %v44
    %v47 = vmul.f32 %v39, %v45
    %v48 = vld [vmem:[%s3] sm:$0x1]
    %v50 = vlaneseq
    %v51 = vshrl.u32 %v50, 7
    %v52 = vsub.s32 0, %v51
    %v53 = vrot.slane %v48, %v52
    %v55 = vadd.f32 %v47, %v53
    %56 = vst [vmem:[#allocation5] sm:$0x3] %v55
    // Predicated region
    $region22: #{tpu_custom_call.1} parent=1 // pred_check
      _
    $region23: #{tpu_custom_call.1} parent=1 // pred_check_branch
      %58 = sbr.rel (0) target = $region25
    $region24: #{tpu_custom_call.1} parent=1 // pred_region
      %s60 = ssub.s32 32, 32
      %61 = vsyncadd [#allocation4], %s60
      %s63 = sshll.u32 [#allocation5], 4
      %s64 = int_to_ptr.vmem [resolvable:$true] %s63
      %66 = dma.vmem_to_hbm [thread:$0]  %s64, 32, %s4, [#allocation4]
    $region25: #{tpu_custom_call.1} parent=1 // pred_fallthru
      _
    // Predicated region
    $region26: #{tpu_custom_call.1} parent=1 // pred_check
      _
    $region27: #{tpu_custom_call.1} parent=1 // pred_check_branch
      %68 = sbr.rel (0) target = $region29
    $region28: #{tpu_custom_call.1} parent=1 // pred_region
      %69 = dma.done [#allocation4], 32
    $region29: #{tpu_custom_call.1} parent=1 // pred_fallthru
      _
    %70 = vsyncpa [#allocation3], 1
    %71 = vsyncpa [#allocation4], 1

</llo_original>
